<compile_context>
chip_gen: v5e
topology: v5e:2x2
jax: 0.10.0
libtpu: 0.0.40
codegen_flags: <defaults>
</compile_context>

<pallas_src>
import jax
import jax.numpy as jnp
from jax.experimental import pallas as pl
from jax.experimental.pallas import tpu as pltpu


def _round_up(x, m):
    return ((x + m - 1) // m) * m


def _pick_batch_tile(N, HW):
    """Largest divisor of N s.t. the per-step matmul M-dim stays moderate and
    (when N > 1) there are >= 2 grid steps for v7x's 2 TensorCores."""
    if HW % 8 != 0:
        return 1                       # keep the in-kernel reshape a free collapse
    best = 1
    for bt in range(1, N + 1):
        if N % bt:
            continue
        rows = bt * HW
        steps = N // bt
        if rows <= 4096 and (steps >= 2 or N == 1):
            best = bt
    return best


def _make_backbone_kernel(B_TILE, HW, Kp, Fp, inv_hw):
    """One grid step: B_TILE images -> conv (as one MXU contraction) -> bias
    -> ReLU -> global-average-pool features."""
    M = B_TILE * HW

    def kernel(col_ref, wc_ref, bc_ref, out_ref):
        # col_ref: (B_TILE, HW, Kp) bf16   wrapper-built im2col, lane-dense
        # wc_ref : (Kp, Fp)         bf16   packed conv weight (K and F padded)
        # bc_ref : (1, Fp)          f32    conv bias
        # out_ref: (B_TILE, 1, Fp)  f32    GAP features (lane-dense)
        col = col_ref[...].reshape(M, Kp)                          # free collapse
        acc = jnp.dot(col, wc_ref[...],
                      preferred_element_type=jnp.float32)          # (M, Fp) f32
        acc = jnp.maximum(acc + bc_ref[...], 0.0)                  # bias+ReLU (f32, v5e-safe)
        pooled = jnp.sum(acc.reshape(B_TILE, HW, Fp), axis=1)      # (B_TILE, Fp)
        out_ref[...] = (pooled * inv_hw).reshape(B_TILE, 1, Fp).astype(out_ref.dtype)

    return kernel


def model_forward(x_nchw, conv_w, conv_b, fc_w, fc_b, *, batch_tile=None):
    """x_nchw: (N, Cin, H, W) f32. conv_w: (3,3,Cin,F) HWIO. fc_w: (F, C).
    Returns logits (N, C) f32."""
    N, Cin, H, W = x_nchw.shape
    F = conv_w.shape[-1]
    C = fc_w.shape[-1]
    HW = H * W
    K = 9 * Cin
    Kp = _round_up(K, 128)             # lane-dense contraction dim
    Fp = _round_up(F, 128)             # lane-dense feature dim

    if batch_tile is None:
        batch_tile = _pick_batch_tile(N, HW)
    assert N % batch_tile == 0, "batch_tile must divide N"

    # ---- layout plumbing in XLA (single pass, bf16 to halve HBM traffic) ----
    # NCHW -> NHWC, conv pad=1, pack the 9 taps into K, pad K -> Kp.
    x_nhwc = jnp.transpose(x_nchw, (0, 2, 3, 1))
    xp = jnp.pad(x_nhwc, ((0, 0), (1, 1), (1, 1), (0, 0)))          # (N,H+2,W+2,Cin)
    taps = [xp[:, kh:kh + H, kw:kw + W, :]
            for kh in range(3) for kw in range(3)]                  # 9 x (N,H,W,Cin)
    col = jnp.concatenate(taps, axis=-1).reshape(N, HW, K)          # tap-major, ch-minor
    col = jnp.pad(col, ((0, 0), (0, 0), (0, Kp - K))).astype(jnp.bfloat16)

    # Packed conv weight: same tap-major/channel-minor K order; zero-padded
    # K rows / F columns keep results exact through bias, ReLU, GAP.
    wc = conv_w.reshape(K, F)
    wc = jnp.pad(wc, ((0, Kp - K), (0, Fp - F))).astype(jnp.bfloat16)
    bc = jnp.pad(conv_b, (0, Fp - F)).reshape(1, Fp).astype(jnp.float32)

    kernel = _make_backbone_kernel(batch_tile, HW, Kp, Fp, 1.0 / HW)

    # VMEM budget from the actual buffers (double-buffered) + headroom.
    col_tile = batch_tile * HW * Kp * 2
    out_tile = batch_tile * Fp * 4
    w_bytes = Kp * Fp * 2 + Fp * 4
    vmem_bytes = 2 * (col_tile + out_tile + w_bytes) + (4 << 20)
    vmem_bytes = int(min(max(vmem_bytes, 8 << 20), 48 << 20))

    feat3 = pl.pallas_call(
        kernel,
        out_shape=jax.ShapeDtypeStruct((N, 1, Fp), jnp.float32),
        grid_spec=pltpu.PrefetchScalarGridSpec(
            num_scalar_prefetch=0,
            grid=(N // batch_tile,),                       # batch tiles
            in_specs=[
                pl.BlockSpec((batch_tile, HW, Kp), lambda b: (b, 0, 0)),
                pl.BlockSpec((Kp, Fp), lambda b: (0, 0)),
                pl.BlockSpec((1, Fp), lambda b: (0, 0)),
            ],
            out_specs=pl.BlockSpec((batch_tile, 1, Fp), lambda b: (b, 0, 0)),
        ),
        compiler_params=pltpu.CompilerParams(
            # batch-tile axis shards across TensorCores (>=2 steps when N>1).
            dimension_semantics=("parallel",),
            vmem_limit_bytes=vmem_bytes,
        ),
    )(col, wc, bc)

    # FC head in XLA: lane-dense, batched over N, f32 like the PyTorch Linear.
    feat = feat3.reshape(N, Fp)[:, :F]
    logits = jnp.dot(feat, fc_w, preferred_element_type=jnp.float32) + fc_b
    return logits.astype(jnp.float32)


def _reference(x_nchw, conv_w, conv_b, fc_w, fc_b, *, match_kernel_dtypes):
    """Pure-JAX reference (PyTorch NCHW semantics). If match_kernel_dtypes,
    mimic the kernel's bf16-operand / f32-accumulate conv numerics."""
    x_nhwc = jnp.transpose(x_nchw, (0, 2, 3, 1))
    if match_kernel_dtypes:
        x_nhwc = x_nhwc.astype(jnp.bfloat16)
        cw = conv_w.astype(jnp.bfloat16)
    else:
        cw = conv_w
    y = jax.lax.conv_general_dilated(
        x_nhwc, cw, window_strides=(1, 1), padding=((1, 1), (1, 1)),
        dimension_numbers=("NHWC", "HWIO", "NHWC"),
        preferred_element_type=jnp.float32)
    y = jnp.maximum(y + conv_b, 0.0)
    feat = y.mean(axis=(1, 2))                               # f32 GAP
    out = jnp.dot(feat, fc_w, preferred_element_type=jnp.float32) + fc_b
    return out.astype(jnp.float32)


if __name__ == "__main__":
    key = jax.random.PRNGKey(0)
    k0, k1, k2, k3, k4 = jax.random.split(key, 5)

    N, Cin, H, W = 2, 4, 16, 16     # input: small NCHW batch
    F = 32                          # backbone feature dim
    num_classes = 8                 # Model(num_classes=8)

    x = jax.random.normal(k0, (N, Cin, H, W), jnp.float32)
    conv_w = jax.random.normal(k1, (3, 3, Cin, F), jnp.float32) * 0.1
    conv_b = jax.random.normal(k2, (F,), jnp.float32) * 0.1
    fc_w = jax.random.normal(k3, (F, num_classes), jnp.float32) * 0.1
    fc_b = jax.random.normal(k4, (num_classes,), jnp.float32) * 0.1

    # Default: batch_tile=1 -> 2 parallel grid steps (one per image).
    out = model_forward(x, conv_w, conv_b, fc_w, fc_b)
    out = jax.block_until_ready(out)
    assert out.shape == (N, num_classes)

    # Also exercise the B_TILE>1 path (both images in one fat grid step).
    out_fat = model_forward(x, conv_w, conv_b, fc_w, fc_b, batch_tile=2)
    out_fat = jax.block_until_ready(out_fat)
    assert jnp.allclose(out, out_fat, atol=1e-5, rtol=1e-5), "tiling mismatch"

    # Tight check vs a reference using the same bf16-operand / f32-accumulate
    # conv numerics, and a loose check vs the full-f32 PyTorch-equivalent math
    # (bf16 operand rounding only).
    ref_match = _reference(x, conv_w, conv_b, fc_w, fc_b, match_kernel_dtypes=True)
    ref_f32 = _reference(x, conv_w, conv_b, fc_w, fc_b, match_kernel_dtypes=False)
    assert jnp.allclose(out, ref_match, atol=2e-3, rtol=2e-3), "mismatch (bf16-matched ref)"
    assert jnp.allclose(out, ref_f32, atol=5e-2, rtol=5e-2), "mismatch (f32 ref)"
    print("KERNEL_OK")
</pallas_src>

<mosaic_0001>
module attributes {stable_mosaic.version = 11 : i64} {
  func.func @kernel(%arg0: i32, %arg1: memref<1x256x128xbf16, #tpu.memory_space<vmem>>, %arg2: memref<128x128xbf16, #tpu.memory_space<vmem>>, %arg3: memref<1x128xf32, #tpu.memory_space<vmem>>, %arg4: memref<1x1x128xf32, #tpu.memory_space<vmem>>) attributes {dimension_semantics = [#tpu.dimension_semantics<parallel>], iteration_bounds = array<i64: 2>, scalar_prefetch = 0 : i64, scratch_operands = 0 : i64, tpu.core_type = #tpu.core_type<tc>, window_params = [{transform_indices = @transform_0, window_bounds = array<i64: 1, 256, 128>}, {pipeline_mode = #tpu.pipeline_mode<synchronous>, transform_indices = @transform_1, window_bounds = array<i64: 128, 128>}, {pipeline_mode = #tpu.pipeline_mode<synchronous>, transform_indices = @transform_2, window_bounds = array<i64: 1, 128>}, {transform_indices = @transform_3, window_bounds = array<i64: 1, 1, 128>}]} {
    %c0 = arith.constant 0 : index
    %c0_0 = arith.constant 0 : index
    %c0_1 = arith.constant 0 : index
    %0 = vector.load %arg1[%c0, %c0_0, %c0_1] : memref<1x256x128xbf16, #tpu.memory_space<vmem>>, vector<1x256x128xbf16>
    %1 = vector.shape_cast %0 : vector<1x256x128xbf16> to vector<256x128xbf16>
    %c0_2 = arith.constant 0 : index
    %c0_3 = arith.constant 0 : index
    %2 = vector.load %arg2[%c0_2, %c0_3] : memref<128x128xbf16, #tpu.memory_space<vmem>>, vector<128x128xbf16>
    %cst = arith.constant dense<0.000000e+00> : vector<256x128xf32>
    %3 = tpu.matmul %1, %2, %cst {dimension_numbers = #tpu.dot_dimension_numbers<[1], [0], [0], [1], [0, 0, 1, 1], [], []>} : vector<256x128xbf16>, vector<128x128xbf16>, vector<256x128xf32> -> vector<256x128xf32>
    %c0_4 = arith.constant 0 : index
    %c0_5 = arith.constant 0 : index
    %4 = vector.load %arg3[%c0_4, %c0_5] : memref<1x128xf32, #tpu.memory_space<vmem>>, vector<1x128xf32>
    %5 = vector.broadcast %4 : vector<1x128xf32> to vector<256x128xf32>
    %6 = arith.addf %3, %5 : vector<256x128xf32>
    %cst_6 = arith.constant 0.000000e+00 : f32
    %7 = vector.broadcast %cst_6 : f32 to vector<256x128xf32>
    %8 = arith.maximumf %6, %7 : vector<256x128xf32>
    %9 = vector.shape_cast %8 : vector<256x128xf32> to vector<1x256x128xf32>
    %cst_7 = arith.constant dense<0.000000e+00> : vector<1x128xf32>
    %10 = vector.multi_reduction <add>, %9, %cst_7 [1] : vector<1x256x128xf32> to vector<1x128xf32>
    %cst_8 = arith.constant 3.906250e-03 : f32
    %11 = vector.broadcast %cst_8 : f32 to vector<1x128xf32>
    %12 = arith.mulf %10, %11 : vector<1x128xf32>
    %13 = vector.shape_cast %12 : vector<1x128xf32> to vector<1x1x128xf32>
    %c0_9 = arith.constant 0 : index
    %c0_10 = arith.constant 0 : index
    %c0_11 = arith.constant 0 : index
    %14 = vector.load %arg4[%c0_9, %c0_10, %c0_11] : memref<1x1x128xf32, #tpu.memory_space<vmem>>, vector<1x1x128xf32>
    tpu.vector_store %arg4[%c0_9, %c0_10, %c0_11], %13 {strides = array<i32>} : memref<1x1x128xf32, #tpu.memory_space<vmem>>, vector<1x1x128xf32>,
    return
  }
  func.func @transform_0(%arg0: i32) -> (i32, i32, i32) {
    %c0_i32 = arith.constant 0 : i32
    %c0_i32_0 = arith.constant 0 : i32
    %c0_i32_1 = arith.constant 0 : i32
    return %arg0, %c0_i32, %c0_i32_0 : i32, i32, i32
  }
  func.func @transform_1(%arg0: i32) -> (i32, i32) {
    %c0_i32 = arith.constant 0 : i32
    %c0_i32_0 = arith.constant 0 : i32
    %c0_i32_1 = arith.constant 0 : i32
    return %c0_i32, %c0_i32_0 : i32, i32
  }
  func.func @transform_2(%arg0: i32) -> (i32, i32) {
    %c0_i32 = arith.constant 0 : i32
    %c0_i32_0 = arith.constant 0 : i32
    %c0_i32_1 = arith.constant 0 : i32
    return %c0_i32, %c0_i32_0 : i32, i32
  }
  func.func @transform_3(%arg0: i32) -> (i32, i32, i32) {
    %c0_i32 = arith.constant 0 : i32
    %c0_i32_0 = arith.constant 0 : i32
    %c0_i32_1 = arith.constant 0 : i32
    return %arg0, %c0_i32, %c0_i32_0 : i32, i32, i32
  }
}

</mosaic_0001>

<llo_original>
// kernel: tpu_custom_call.1
$region0: #{tpu_custom_call.1}
  #allocation0 [shape = 'u32[]', space=smem, size = 0x4, offset = 0x4, fixed_abs, tag = 'smem constant byte address 0x4 - core index']
  #allocation1 [shape = 'u32[72,128]{1,0:T(1,128)}', space=vmem, size = 0x9000, scoped, tag = 'internal scratch']
  %s0 = inlined_call_operand.hbm [shape: bf16[2,256,128], index: 0, kind: input, shape index: {}]
  %s1 = inlined_call_operand.hbm [shape: bf16[128,128], index: 1, kind: input, shape index: {}]
  %s2 = inlined_call_operand.vmem [shape: f32[1,128], index: 2, kind: input, shape index: {}]
  %s3 = inlined_call_operand.hbm [shape: f32[2,1,128], index: 3, kind: output, shape index: {}]
  %s4 = sld [smem:[#allocation0]]
  $region53: #{tpu_custom_call.1} parent=0
    _
  %s6 = ssub.s32 1, %s4
  %s7 = scalar_select 0, %s6, %s4
  $region1: #{tpu_custom_call.1} parent=0
    #allocation2 [shape = 'u8[131072]{0}', space=vmem, size = 0x20000, scoped, tag = 'input window, operand 0']
    #allocation3 [shape = 's32[2]{0}', space=sflag, size = 0x8, scoped, tag = 'scoped memory for tpu_custom_call.1']
    #allocation4 [shape = 's32[2]{0}', space=sflag, size = 0x8, scoped, tag = 'scoped memory for tpu_custom_call.1']
    #allocation5 [shape = 'u8[32768]{0}', space=vmem, size = 0x8000, scoped, tag = 'input window, operand 1, single buffered']
    #allocation6 [shape = 's32[1]{0}', space=sflag, size = 0x4, scoped, tag = 'scoped memory for tpu_custom_call.1']
    #allocation7 [shape = 'u8[1024]{0}', space=vmem, size = 0x400, scoped, tag = 'output window, operand 0']
    %8 = vsyncpa [#allocation3], 0
    %s9 = scalar_lea.sflag [#allocation3], 1
    %10 = vsyncpa %s9, 0
    %11 = vsyncpa [#allocation6], 0
    %12 = vsyncpa [#allocation4], 0
    %s13 = scalar_lea.sflag [#allocation4], 1
    %14 = vsyncpa %s13, 0
    loop: start=0, step=1, limit=4
    $region2: #{tpu_custom_call.1} parent=1 // loop_pre_header
      _
    $region3: #{tpu_custom_call.1} parent=1 // loop_header
      %s16 = sphi 0, %s20
      %p17 = scmp.ge.s32.totalorder %s16, 4
      %s26 = sphi 0, %s28
      %s29 = sphi 0, %s26
      %s30 = sphi 0, %s29
      %s46 = sphi 0, %s30
      %s50 = sphi 0, %s50
      %s52 = sphi 0, %s50
      %s53 = sphi 0, %s52
      %s67 = sphi 0, %s53
      %s71 = sphi 0, %s71
      %s73 = sphi 0, %s71
      %s74 = sphi 0, %s73
      %s88 = sphi 0, %s74
      %s94 = sphi 0, %s96
      %s97 = sphi 0, %s94
      %s98 = sphi 0, %s97
      %s114 = sphi 0, %s98
    $region4: #{tpu_custom_call.1} parent=1 // loop_header_branch
      %19 = sbr.rel (%p17) target = $region8
    $region5: #{tpu_custom_call.1} parent=1 // loop_body
      %s21 = ssub.s32 %s16, 1
      %s22 = ssub.s32 %s16, 2
      %s23 = sadd.s32 %s16, 1
      %s24 = ssub.s32 %s16, %s23
      %p25 = scmp.eq.s32.totalorder %s24, 0
      %s27 = sadd.s32 %s26, 1
      %s28 = scalar_select %p25, %s26, %s27
      %p31 = pneg %p25
      %p32 = scmp.eq.s32.totalorder %s16, 1
      %p33 = por %p31, %p32
      %p34 = scmp.ne.s32.totalorder %s26, %s29
      %p35 = scmp.eq.s32.totalorder %s16, 0
      %p36 = por %p34, %p35
      %p37 = scmp.ne.s32.totalorder %s26, %s29
      %p38 = scmp.eq.s32.totalorder %s21, 1
      %p39 = por %p37, %p38
      %p40 = scmp.ne.s32.totalorder %s29, %s30
      %p41 = scmp.eq.s32.totalorder %s21, 0
      %p42 = por %p40, %p41
      %p43 = scmp.ne.s32.totalorder %s29, %s30
      %p44 = scmp.eq.s32.totalorder %s22, 1
      %p45 = por %p43, %p44
      %p47 = scmp.ne.s32.totalorder %s30, %s46
      %p48 = scmp.eq.s32.totalorder %s22, 0
      %p49 = por %p47, %p48
      %s51 = sadd.s32 %s50, 1
      %p54 = scmp.eq.s32.totalorder %s16, 1
      %p55 = scmp.ne.s32.totalorder %s50, %s52
      %p56 = scmp.eq.s32.totalorder %s16, 0
      %p57 = por %p55, %p56
      %p58 = scmp.ne.s32.totalorder %s50, %s52
      %p59 = scmp.eq.s32.totalorder %s21, 1
      %p60 = por %p58, %p59
      %p61 = scmp.ne.s32.totalorder %s52, %s53
      %p62 = scmp.eq.s32.totalorder %s21, 0
      %p63 = por %p61, %p62
      %p64 = scmp.ne.s32.totalorder %s52, %s53
      %p65 = scmp.eq.s32.totalorder %s22, 1
      %p66 = por %p64, %p65
      %p68 = scmp.ne.s32.totalorder %s53, %s67
      %p69 = scmp.eq.s32.totalorder %s22, 0
      %p70 = por %p68, %p69
      %s72 = sadd.s32 %s71, 1
      %p75 = scmp.eq.s32.totalorder %s16, 1
      %p76 = scmp.ne.s32.totalorder %s71, %s73
      %p77 = scmp.eq.s32.totalorder %s16, 0
      %p78 = por %p76, %p77
      %p79 = scmp.ne.s32.totalorder %s71, %s73
      %p80 = scmp.eq.s32.totalorder %s21, 1
      %p81 = por %p79, %p80
      %p82 = scmp.ne.s32.totalorder %s73, %s74
      %p83 = scmp.eq.s32.totalorder %s21, 0
      %p84 = por %p82, %p83
      %p85 = scmp.ne.s32.totalorder %s73, %s74
      %p86 = scmp.eq.s32.totalorder %s22, 1
      %p87 = por %p85, %p86
      %p89 = scmp.ne.s32.totalorder %s74, %s88
      %p90 = scmp.eq.s32.totalorder %s22, 0
      %p91 = por %p89, %p90
      %s92 = ssub.s32 %s16, %s23
      %p93 = scmp.eq.s32.totalorder %s92, 0
      %s95 = sadd.s32 %s94, 1
      %s96 = scalar_select %p93, %s94, %s95
      %p99 = pneg %p93
      %p100 = scmp.eq.s32.totalorder %s16, 1
      %p101 = por %p99, %p100
      %p102 = scmp.ne.s32.totalorder %s94, %s97
      %p103 = scmp.eq.s32.totalorder %s16, 0
      %p104 = por %p102, %p103
      %p105 = scmp.ne.s32.totalorder %s94, %s97
      %p106 = scmp.eq.s32.totalorder %s21, 1
      %p107 = por %p105, %p106
      %p108 = scmp.ne.s32.totalorder %s97, %s98
      %p109 = scmp.eq.s32.totalorder %s21, 0
      %p110 = por %p108, %p109
      %p111 = scmp.ne.s32.totalorder %s97, %s98
      %p112 = scmp.eq.s32.totalorder %s22, 1
      %p113 = por %p111, %p112
      %p115 = scmp.ne.s32.totalorder %s98, %s114
      %p116 = scmp.eq.s32.totalorder %s22, 0
      %p117 = por %p115, %p116
      %p118 = scmp.le.s32.totalorder 1, %s16
      %p119 = scmp.lt.s32.totalorder %s16, 3
      %p120 = pnand %p118, %p119
      %p121 = pneg %p120
      // Predicated region
      $region9: #{tpu_custom_call.1} parent=5 // pred_check
        _
      $region10: #{tpu_custom_call.1} parent=5 // pred_check_branch
        %123 = sbr.rel (%p120) target = $region12
      $region11: #{tpu_custom_call.1} parent=5 // pred_region
        %s124 = ssub.s32 %s16, 1
        // Predicated region
        $region13: #{tpu_custom_call.1} parent=11 // pred_check
          %p125 = pneg %p63
        $region14: #{tpu_custom_call.1} parent=11 // pred_check_branch
          %127 = sbr.rel (%p125) target = $region16
        $region15: #{tpu_custom_call.1} parent=11 // pred_region
          %129 = vsyncadd [#allocation6], 0
          %s130 = sshll.u32 %s1, 4
          %s131 = int_to_ptr.hbm [resolvable:$true] %s130
          %s132 = sshll.u32 [#allocation5], 4
          %s133 = int_to_ptr.vmem [resolvable:$true] %s132
          %138 = dma.hbm_to_vmem [thread:$0]  %s131, 1024, %s133, [#allocation6], 64, 64, 4
        $region16: #{tpu_custom_call.1} parent=11 // pred_fallthru
          _
        // Predicated region
        $region17: #{tpu_custom_call.1} parent=11 // pred_check
          %p139 = pneg %p84
        $region18: #{tpu_custom_call.1} parent=11 // pred_check_branch
          %141 = sbr.rel (%p139) target = $region20
        $region19: #{tpu_custom_call.1} parent=11 // pred_region
          _
        $region20: #{tpu_custom_call.1} parent=11 // pred_fallthru
          _
      $region12: #{tpu_custom_call.1} parent=5 // pred_fallthru
        _
      %p142 = scmp.lt.s32.totalorder %s16, 2
      // Predicated region
      $region21: #{tpu_custom_call.1} parent=5 // pred_check
        %p143 = pneg %p142
      $region22: #{tpu_custom_call.1} parent=5 // pred_check_branch
        %145 = sbr.rel (%p143) target = $region24
      $region23: #{tpu_custom_call.1} parent=5 // pred_region
        // Predicated region
        $region25: #{tpu_custom_call.1} parent=23 // pred_check
          %p146 = pneg %p36
        $region26: #{tpu_custom_call.1} parent=23 // pred_check_branch
          %148 = sbr.rel (%p146) target = $region28
        $region27: #{tpu_custom_call.1} parent=23 // pred_region
          %s149 = sand.u32 %s26, 1
          %s150 = scalar_lea.sflag [#allocation3], %s149
          %s151 = sand.u32 %s26, 1
          %s152 = smul.addr %s151, 128
          %s153 = scalar_lea.vmem [#allocation2], %s152
          %155 = vsyncadd %s150, 0
          %s156 = smul.addr %s16, 32
          %s157 = smul.addr %s156, 4
          %s158 = scalar_lea.hbm %s0, %s157
          %s159 = sshll.u32 %s158, 4
          %s160 = int_to_ptr.hbm [resolvable:$true] %s159
          %s161 = sshll.u32 %s153, 4
          %s162 = int_to_ptr.vmem [resolvable:$true] %s161
          %167 = dma.hbm_to_vmem [thread:$0]  %s160, 2048, %s162, %s150, 64, 64, 4
        $region28: #{tpu_custom_call.1} parent=23 // pred_fallthru
          _
      $region24: #{tpu_custom_call.1} parent=5 // pred_fallthru
        _
      %p168 = scmp.le.s32.totalorder 1, %s16
      %p169 = scmp.lt.s32.totalorder %s16, 3
      %p170 = pnand %p168, %p169
      %p171 = pneg %p170
      // Predicated region
      $region29: #{tpu_custom_call.1} parent=5 // pred_check
        _
      $region30: #{tpu_custom_call.1} parent=5 // pred_check_branch
        %173 = sbr.rel (%p170) target = $region32
      $region31: #{tpu_custom_call.1} parent=5 // pred_region
        %s174 = ssub.s32 %s16, 1
        %s175 = sand.u32 %s29, 1
        %s176 = scalar_lea.sflag [#allocation3], %s175
        %s177 = sand.u32 %s29, 1
        %s178 = smul.addr %s177, 128
        %s179 = scalar_lea.vmem [#allocation2], %s178
        // Predicated region
        $region33: #{tpu_custom_call.1} parent=31 // pred_check
          %p180 = pneg %p42
        $region34: #{tpu_custom_call.1} parent=31 // pred_check_branch
          %182 = sbr.rel (%p180) target = $region36
        $region35: #{tpu_custom_call.1} parent=31 // pred_region
          %184 = dma.done %s176, 2048
        $region36: #{tpu_custom_call.1} parent=31 // pred_fallthru
          _
        // Predicated region
        $region37: #{tpu_custom_call.1} parent=31 // pred_check
          %p185 = pneg %p63
        $region38: #{tpu_custom_call.1} parent=31 // pred_check_branch
          %187 = sbr.rel (%p185) target = $region40
        $region39: #{tpu_custom_call.1} parent=31 // pred_region
          %189 = dma.done [#allocation6], 1024
        $region40: #{tpu_custom_call.1} parent=31 // pred_fallthru
          _
        %s190 = sand.u32 %s29, 1
        %s191 = scalar_lea.sflag [#allocation3], %s190
        %s192 = sand.u32 %s29, 1
        %s193 = smul.addr %s192, 128
        %s194 = scalar_lea.vmem [#allocation2], %s193
        %p195 = pneg %p42
        %p196 = pneg %p39
        %p197 = pneg %p63
        %p198 = pneg %p60
        %p199 = pneg %p84
        %p200 = pneg %p81
        %p201 = pneg %p110
        %p202 = pneg %p107
        %s203 = sand.u32 %s97, 1
        %s204 = scalar_lea.sflag [#allocation4], %s203
        %s205 = sand.u32 %s97, 1
        %s206 = scalar_lea.vmem [#allocation7], %s205
        %v207 = vld [vmem:[%s179] sm:$0xf]
        %v208 = vld [vmem:[%s179 + $0x4] sm:$0xf]
        %v209 = vld [vmem:[%s179 + $0x8] sm:$0xf]
        %v210 = vld [vmem:[%s179 + $0xc] sm:$0xf]
        %v211 = vld [vmem:[%s179 + $0x10] sm:$0xf]
        %v212 = vld [vmem:[%s179 + $0x14] sm:$0xf]
        %v213 = vld [vmem:[%s179 + $0x18] sm:$0xf]
        %v214 = vld [vmem:[%s179 + $0x1c] sm:$0xf]
        %v215 = vld [vmem:[%s179 + $0x20] sm:$0xf]
        %v216 = vld [vmem:[%s179 + $0x24] sm:$0xf]
        %v217 = vld [vmem:[%s179 + $0x28] sm:$0xf]
        %v218 = vld [vmem:[%s179 + $0x2c] sm:$0xf]
        %v219 = vld [vmem:[%s179 + $0x30] sm:$0xf]
        %v220 = vld [vmem:[%s179 + $0x34] sm:$0xf]
        %v221 = vld [vmem:[%s179 + $0x38] sm:$0xf]
        %v222 = vld [vmem:[%s179 + $0x3c] sm:$0xf]
        %v223 = vld [vmem:[%s179 + $0x40] sm:$0xf]
        %v224 = vld [vmem:[%s179 + $0x44] sm:$0xf]
        %v225 = vld [vmem:[%s179 + $0x48] sm:$0xf]
        %v226 = vld [vmem:[%s179 + $0x4c] sm:$0xf]
        %v227 = vld [vmem:[%s179 + $0x50] sm:$0xf]
        %v228 = vld [vmem:[%s179 + $0x54] sm:$0xf]
        %v229 = vld [vmem:[%s179 + $0x58] sm:$0xf]
        %v230 = vld [vmem:[%s179 + $0x5c] sm:$0xf]
        %v231 = vld [vmem:[%s179 + $0x60] sm:$0xf]
        %v232 = vld [vmem:[%s179 + $0x64] sm:$0xf]
        %v233 = vld [vmem:[%s179 + $0x68] sm:$0xf]
        %v234 = vld [vmem:[%s179 + $0x6c] sm:$0xf]
        %v235 = vld [vmem:[%s179 + $0x70] sm:$0xf]
        %v236 = vld [vmem:[%s179 + $0x74] sm:$0xf]
        %v237 = vld [vmem:[%s179 + $0x78] sm:$0xf]
        %v238 = vld [vmem:[%s179 + $0x7c] sm:$0xf]
        %v239 = vld [vmem:[#allocation5] sm:$0xf]
        %v240 = vld [vmem:[#allocation5 + $0x4] sm:$0xf]
        %v241 = vld [vmem:[#allocation5 + $0x8] sm:$0xf]
        %v242 = vld [vmem:[#allocation5 + $0xc] sm:$0xf]
        %v243 = vld [vmem:[#allocation5 + $0x10] sm:$0xf]
        %v244 = vld [vmem:[#allocation5 + $0x14] sm:$0xf]
        %v245 = vld [vmem:[#allocation5 + $0x18] sm:$0xf]
        %v246 = vld [vmem:[#allocation5 + $0x1c] sm:$0xf]
        %v247 = vld [vmem:[#allocation5 + $0x20] sm:$0xf]
        %v248 = vld [vmem:[#allocation5 + $0x24] sm:$0xf]
        %v249 = vld [vmem:[#allocation5 + $0x28] sm:$0xf]
        %v250 = vld [vmem:[#allocation5 + $0x2c] sm:$0xf]
        %v251 = vld [vmem:[#allocation5 + $0x30] sm:$0xf]
        %v252 = vld [vmem:[#allocation5 + $0x34] sm:$0xf]
        %v253 = vld [vmem:[#allocation5 + $0x38] sm:$0xf]
        %v254 = vld [vmem:[#allocation5 + $0x3c] sm:$0xf]
        %v255 = vld [vmem:[%s2] sm:$0x1]
        %v257 = vperm.slane %v255, 0
        %v291 = vunpack.c.l.b16 %v207
        %v292 = vunpack.c.l.b16 %v208
        %v293 = vunpack.c.l.b16 %v209
        %v294 = vunpack.c.l.b16 %v210
        %v295 = vunpack.c.l.b16 %v211
        %v296 = vunpack.c.l.b16 %v212
        %v297 = vunpack.c.l.b16 %v213
        %v298 = vunpack.c.l.b16 %v214
        %v299 = vunpack.c.l.b16 %v215
        %v300 = vunpack.c.l.b16 %v216
        %v301 = vunpack.c.l.b16 %v217
        %v302 = vunpack.c.l.b16 %v218
        %v303 = vunpack.c.l.b16 %v219
        %v304 = vunpack.c.l.b16 %v220
        %v305 = vunpack.c.l.b16 %v221
        %v306 = vunpack.c.l.b16 %v222
        %v307 = vunpack.c.l.b16 %v223
        %v308 = vunpack.c.l.b16 %v224
        %v309 = vunpack.c.l.b16 %v225
        %v310 = vunpack.c.l.b16 %v226
        %v311 = vunpack.c.l.b16 %v227
        %v312 = vunpack.c.l.b16 %v228
        %v313 = vunpack.c.l.b16 %v229
        %v314 = vunpack.c.l.b16 %v230
        %v315 = vunpack.c.l.b16 %v231
        %v316 = vunpack.c.l.b16 %v232
        %v317 = vunpack.c.l.b16 %v233
        %v318 = vunpack.c.l.b16 %v234
        %v319 = vunpack.c.l.b16 %v235
        %v320 = vunpack.c.l.b16 %v236
        %v321 = vunpack.c.l.b16 %v237
        %v322 = vunpack.c.l.b16 %v238
        %v323 = vpack.c.b16 %v292, %v291
        %v324 = vpack.c.b16 %v294, %v293
        %v325 = vpack.c.b16 %v296, %v295
        %v326 = vpack.c.b16 %v298, %v297
        %v327 = vpack.c.b16 %v300, %v299
        %v328 = vpack.c.b16 %v302, %v301
        %v329 = vpack.c.b16 %v304, %v303
        %v330 = vpack.c.b16 %v306, %v305
        %v331 = vpack.c.b16 %v308, %v307
        %v332 = vpack.c.b16 %v310, %v309
        %v333 = vpack.c.b16 %v312, %v311
        %v334 = vpack.c.b16 %v314, %v313
        %v335 = vpack.c.b16 %v316, %v315
        %v336 = vpack.c.b16 %v318, %v317
        %v337 = vpack.c.b16 %v320, %v319
        %v338 = vpack.c.b16 %v322, %v321
        %v371 = vunpack.c.l.b16 %v239
        %v372 = vunpack.c.l.b16 %v240
        %v373 = vunpack.c.l.b16 %v241
        %v374 = vunpack.c.l.b16 %v242
        %v375 = vunpack.c.l.b16 %v243
        %v376 = vunpack.c.l.b16 %v244
        %v377 = vunpack.c.l.b16 %v245
        %v378 = vunpack.c.l.b16 %v246
        %v379 = vunpack.c.l.b16 %v247
        %v380 = vunpack.c.l.b16 %v248
        %v381 = vunpack.c.l.b16 %v249
        %v382 = vunpack.c.l.b16 %v250
        %v383 = vunpack.c.l.b16 %v251
        %v384 = vunpack.c.l.b16 %v252
        %v385 = vunpack.c.l.b16 %v253
        %v386 = vunpack.c.l.b16 %v254
        %v387 = vpack.c.b16 %v372, %v371
        %v388 = vpack.c.b16 %v374, %v373
        %v389 = vpack.c.b16 %v376, %v375
        %v390 = vpack.c.b16 %v378, %v377
        %v391 = vpack.c.b16 %v380, %v379
        %v392 = vpack.c.b16 %v382, %v381
        %v393 = vpack.c.b16 %v384, %v383
        %v394 = vpack.c.b16 %v386, %v385
        %403 = vmatpush.bf16.msra.mxu0 %v394
        %404 = vmatpush.bf16.msra.mxu0 %v393
        %405 = vmatpush.bf16.msra.mxu0 %v392
        %406 = vmatpush.bf16.msra.mxu0 %v391
        %407 = vmatpush.bf16.msra.mxu0 %v390
        %408 = vmatpush.bf16.msra.mxu0 %v389
        %409 = vmatpush.bf16.msra.mxu0 %v388
        %410 = vmatpush.bf16.msra.mxu0 %v387
        %411 = vmatmul.bf16.gmra.mxu0 %v323
        %v412 = vpop.f32.mrf.mxu0
        %v413 = vadd.f32 %v257, %v412
        %v414 = vpop.f32.mrf.mxu0
        %v415 = vadd.f32 %v257, %v414
        %416 = vmatmul.bf16.gmra.mxu0 %v324
        %v417 = vpop.f32.mrf.mxu0
        %v418 = vadd.f32 %v257, %v417
        %v419 = vpop.f32.mrf.mxu0
        %v420 = vadd.f32 %v257, %v419
        %421 = vmatmul.bf16.gmra.mxu0 %v325
        %v422 = vpop.f32.mrf.mxu0
        %v423 = vadd.f32 %v257, %v422
        %v424 = vpop.f32.mrf.mxu0
        %v425 = vadd.f32 %v257, %v424
        %426 = vmatmul.bf16.gmra.mxu0 %v326
        %v427 = vpop.f32.mrf.mxu0
        %v428 = vadd.f32 %v257, %v427
        %v429 = vpop.f32.mrf.mxu0
        %v430 = vadd.f32 %v257, %v429
        %431 = vmatmul.bf16.gmra.mxu0 %v327
        %v432 = vpop.f32.mrf.mxu0
        %v433 = vadd.f32 %v257, %v432
        %v434 = vpop.f32.mrf.mxu0
        %v435 = vadd.f32 %v257, %v434
        %436 = vmatmul.bf16.gmra.mxu0 %v328
        %v437 = vpop.f32.mrf.mxu0
        %v438 = vadd.f32 %v257, %v437
        %v439 = vpop.f32.mrf.mxu0
        %v440 = vadd.f32 %v257, %v439
        %441 = vmatmul.bf16.gmra.mxu0 %v329
        %v442 = vpop.f32.mrf.mxu0
        %v443 = vadd.f32 %v257, %v442
        %v444 = vpop.f32.mrf.mxu0
        %v445 = vadd.f32 %v257, %v444
        %446 = vmatmul.bf16.gmra.mxu0 %v330
        %v447 = vpop.f32.mrf.mxu0
        %v448 = vadd.f32 %v257, %v447
        %v449 = vpop.f32.mrf.mxu0
        %v450 = vadd.f32 %v257, %v449
        %451 = vmatmul.bf16.gmra.mxu0 %v331
        %v452 = vpop.f32.mrf.mxu0
        %v453 = vadd.f32 %v257, %v452
        %v454 = vpop.f32.mrf.mxu0
        %v455 = vadd.f32 %v257, %v454
        %456 = vmatmul.bf16.gmra.mxu0 %v332
        %v457 = vpop.f32.mrf.mxu0
        %v458 = vadd.f32 %v257, %v457
        %v459 = vpop.f32.mrf.mxu0
        %v460 = vadd.f32 %v257, %v459
        %461 = vmatmul.bf16.gmra.mxu0 %v333
        %v462 = vpop.f32.mrf.mxu0
        %v463 = vadd.f32 %v257, %v462
        %v464 = vpop.f32.mrf.mxu0
        %v465 = vadd.f32 %v257, %v464
        %466 = vmatmul.bf16.gmra.mxu0 %v334
        %v467 = vpop.f32.mrf.mxu0
        %v468 = vadd.f32 %v257, %v467
        %v469 = vpop.f32.mrf.mxu0
        %v470 = vadd.f32 %v257, %v469
        %471 = vmatmul.bf16.gmra.mxu0 %v335
        %v472 = vpop.f32.mrf.mxu0
        %v473 = vadd.f32 %v257, %v472
        %v474 = vpop.f32.mrf.mxu0
        %v475 = vadd.f32 %v257, %v474
        %476 = vmatmul.bf16.gmra.mxu0 %v336
        %v477 = vpop.f32.mrf.mxu0
        %v478 = vadd.f32 %v257, %v477
        %v479 = vpop.f32.mrf.mxu0
        %v480 = vadd.f32 %v257, %v479
        %481 = vmatmul.bf16.gmra.mxu0 %v337
        %v482 = vpop.f32.mrf.mxu0
        %v483 = vadd.f32 %v257, %v482
        %v484 = vpop.f32.mrf.mxu0
        %v485 = vadd.f32 %v257, %v484
        %486 = vmatmul.bf16.gmra.mxu0 %v338
        %v487 = vpop.f32.mrf.mxu0
        %v488 = vadd.f32 %v257, %v487
        %v489 = vpop.f32.mrf.mxu0
        %v490 = vadd.f32 %v257, %v489
        %491 = vdwg.mxu0
        %v492 = vmax.f32 %v413, 0.0
        %v493 = vmax.f32 %v415, 0.0
        %v494 = vmax.f32 %v418, 0.0
        %v495 = vmax.f32 %v420, 0.0
        %v496 = vmax.f32 %v423, 0.0
        %v497 = vmax.f32 %v425, 0.0
        %v498 = vmax.f32 %v428, 0.0
        %v499 = vmax.f32 %v430, 0.0
        %v500 = vmax.f32 %v433, 0.0
        %v501 = vmax.f32 %v435, 0.0
        %v502 = vmax.f32 %v438, 0.0
        %v503 = vmax.f32 %v440, 0.0
        %v504 = vmax.f32 %v443, 0.0
        %v505 = vmax.f32 %v445, 0.0
        %v506 = vmax.f32 %v448, 0.0
        %v507 = vmax.f32 %v450, 0.0
        %v508 = vmax.f32 %v453, 0.0
        %v509 = vmax.f32 %v455, 0.0
        %v510 = vmax.f32 %v458, 0.0
        %v511 = vmax.f32 %v460, 0.0
        %v512 = vmax.f32 %v463, 0.0
        %v513 = vmax.f32 %v465, 0.0
        %v514 = vmax.f32 %v468, 0.0
        %v515 = vmax.f32 %v470, 0.0
        %v516 = vmax.f32 %v473, 0.0
        %v517 = vmax.f32 %v475, 0.0
        %v518 = vmax.f32 %v478, 0.0
        %v519 = vmax.f32 %v480, 0.0
        %v520 = vmax.f32 %v483, 0.0
        %v521 = vmax.f32 %v485, 0.0
        %v522 = vmax.f32 %v488, 0.0
        %v523 = vmax.f32 %v490, 0.0
        %v524 = vadd.f32 %v492, %v493
        %v525 = vadd.f32 %v524, %v494
        %v526 = vadd.f32 %v525, %v495
        %v527 = vadd.f32 %v526, %v496
        %v528 = vadd.f32 %v527, %v497
        %v529 = vadd.f32 %v528, %v498
        %v530 = vadd.f32 %v529, %v499
        %v531 = vadd.f32 %v530, %v500
        %v532 = vadd.f32 %v531, %v501
        %v533 = vadd.f32 %v532, %v502
        %v534 = vadd.f32 %v533, %v503
        %v535 = vadd.f32 %v534, %v504
        %v536 = vadd.f32 %v535, %v505
        %v537 = vadd.f32 %v536, %v506
        %v538 = vadd.f32 %v537, %v507
        %v539 = vadd.f32 %v538, %v508
        %v540 = vadd.f32 %v539, %v509
        %v541 = vadd.f32 %v540, %v510
        %v542 = vadd.f32 %v541, %v511
        %v543 = vadd.f32 %v542, %v512
        %v544 = vadd.f32 %v543, %v513
        %v545 = vadd.f32 %v544, %v514
        %v546 = vadd.f32 %v545, %v515
        %v547 = vadd.f32 %v546, %v516
        %v548 = vadd.f32 %v547, %v517
        %v549 = vadd.f32 %v548, %v518
        %v550 = vadd.f32 %v549, %v519
        %v551 = vadd.f32 %v550, %v520
        %v552 = vadd.f32 %v551, %v521
        %v553 = vadd.f32 %v552, %v522
        %v554 = vadd.f32 %v553, %v523
        %v555 = vrot.slane %v554, 4
        %v556 = vadd.f32 %v554, %v555
        %v557 = vrot.slane %v556, 2
        %v558 = vadd.f32 %v556, %v557
        %v559 = vrot.slane %v558, 1
        %v560 = vadd.f32 %v558, %v559
        %v561 = vmul.f32 %v560, 0.00390625
        %562 = vst [vmem:[%s206] sm:$0x1] %v561
        %s563 = sand.u32 %s97, 1
        %s564 = scalar_lea.sflag [#allocation4], %s563
        %s565 = sand.u32 %s97, 1
        %s566 = scalar_lea.vmem [#allocation7], %s565
        // Predicated region
        $region41: #{tpu_custom_call.1} parent=31 // pred_check
          %p567 = pneg %p107
        $region42: #{tpu_custom_call.1} parent=31 // pred_check_branch
          %569 = sbr.rel (%p567) target = $region44
        $region43: #{tpu_custom_call.1} parent=31 // pred_region
          %571 = vsyncadd %s564, 0
          %s572 = scalar_lea.hbm %s3, %s21
          %s574 = sshll.u32 %s566, 4
          %s575 = int_to_ptr.vmem [resolvable:$true] %s574
          %s576 = sshll.u32 %s572, 4
          %s577 = int_to_ptr.hbm [resolvable:$true] %s576
          %579 = dma.vmem_to_hbm [thread:$0]  %s575, 16, %s577, %s564
        $region44: #{tpu_custom_call.1} parent=31 // pred_fallthru
          _
      $region32: #{tpu_custom_call.1} parent=5 // pred_fallthru
        _
      %p580 = scmp.le.s32.totalorder 2, %s16
      // Predicated region
      $region45: #{tpu_custom_call.1} parent=5 // pred_check
        %p581 = pneg %p580
      $region46: #{tpu_custom_call.1} parent=5 // pred_check_branch
        %583 = sbr.rel (%p581) target = $region48
      $region47: #{tpu_custom_call.1} parent=5 // pred_region
        %s584 = ssub.s32 %s16, 2
        // Predicated region
        $region49: #{tpu_custom_call.1} parent=47 // pred_check
          %p585 = pneg %p113
        $region50: #{tpu_custom_call.1} parent=47 // pred_check_branch
          %587 = sbr.rel (%p585) target = $region52
        $region51: #{tpu_custom_call.1} parent=47 // pred_region
          %s588 = sand.u32 %s98, 1
          %s589 = scalar_lea.sflag [#allocation4], %s588
          %s590 = sand.u32 %s98, 1
          %s591 = scalar_lea.vmem [#allocation7], %s590
          %593 = dma.done %s589, 16
        $region52: #{tpu_custom_call.1} parent=47 // pred_fallthru
          _
      $region48: #{tpu_custom_call.1} parent=5 // pred_fallthru
        _
    $region6: #{tpu_custom_call.1} parent=1 // loop_footer
      %s20 = sadd.s32 1, %s16
    $region7: #{tpu_custom_call.1} parent=1 // loop_footer_branch
      %15 = sbr.rel target = $region3
    $region8: #{tpu_custom_call.1} parent=1 // loop_exit
      _
    %594 = vsyncpa [#allocation3], 1
    %s595 = scalar_lea.sflag [#allocation3], 1
    %596 = vsyncpa %s595, 1
    %597 = vsyncpa [#allocation6], 1
    %598 = vsyncpa [#allocation4], 1
    %s599 = scalar_lea.sflag [#allocation4], 1
    %600 = vsyncpa %s599, 1

</llo_original>
